<compile_context>
chip_gen: v5e
topology: v5e:2x2
jax: 0.10.0
libtpu: 0.0.40
codegen_flags: <defaults>
</compile_context>

<pallas_src>
import numpy as np
import jax
import jax.numpy as jnp
from jax.experimental import pallas as pl
from jax.experimental.pallas import tpu as pltpu


def multivae_kernel(x_ref, eps_ref, w1_ref, b1_ref, w2_ref, b2_ref,
                    w3_ref, b3_ref, w4_ref, b4_ref,
                    out_ref, h_ref):
    """One (TM, *) batch tile of the MultiVAE forward. Weights are VMEM-resident."""
    x = x_ref[...].astype(jnp.bfloat16)                       # (TM, N) bf16 for MXU

    # ---- encoder: Linear(N,H) -> Tanh -> Linear(H,L), f32 accumulate ----
    h1 = jnp.tanh(
        jnp.dot(x, w1_ref[...], preferred_element_type=jnp.float32)
        + b1_ref[...])                                        # (TM, H) f32
    h = (jnp.dot(h1.astype(jnp.bfloat16), w2_ref[...],
                 preferred_element_type=jnp.float32)
         + b2_ref[...])                                       # (TM, L) f32

    half = w3_ref.shape[0]                                    # L // 2 (static)
    mu = h[:, :half]                                          # (TM, L//2)
    logvar = h[:, half:]                                      # (TM, L - L//2)

    # ---- reparameterize (training): z = mu + eps * exp(0.5*logvar), f32 ----
    z = mu + eps_ref[...] * jnp.exp(0.5 * logvar)             # (TM, L//2)

    # ---- decoder: Linear(L//2,H) -> Tanh -> Linear(H,N) ----
    d1 = jnp.tanh(
        jnp.dot(z.astype(jnp.bfloat16), w3_ref[...],
                preferred_element_type=jnp.float32)
        + b3_ref[...])                                        # (TM, H) f32
    out = (jnp.dot(d1.astype(jnp.bfloat16), w4_ref[...],
                   preferred_element_type=jnp.float32)
           + b4_ref[...])                                     # (TM, N) f32

    # Two full-width stores only: decoder output + encoder output h.
    out_ref[...] = out
    h_ref[...] = h


def _round_up(x, m):
    return ((x + m - 1) // m) * m


def multivae_forward(x, params, eps, *, tm=128):
    """Pallas wrapper.

    x:   (B, N) float32
    eps: (B, L//2) float32 reparameterization noise
    Returns (decoder_out (B,N), mu (B,L//2), logvar (B,L-L//2)), all float32.
    """
    w1, b1, w2, b2, w3, b3, w4, b4 = params
    B, N = x.shape
    L = w2.shape[1]
    half = w3.shape[0]            # = L // 2

    # Batch tile: at least 8 (sublane), at most `tm`; pad B up to a multiple.
    tm = min(tm, max(8, _round_up(B, 8)))
    b_pad = _round_up(B, tm)
    if b_pad != B:
        x = jnp.pad(x, ((0, b_pad - B), (0, 0)))
        eps = jnp.pad(eps, ((0, b_pad - B), (0, 0)))
    grid = (b_pad // tm,)

    def act_spec(cols):           # batch-tiled, double-buffered activations
        return pl.BlockSpec((tm, cols), lambda i: (i, 0))

    def resident(shape):          # constant index_map -> stays in VMEM across grid
        return pl.BlockSpec(shape, lambda i: (0, 0))

    out, h = pl.pallas_call(
        multivae_kernel,
        out_shape=(jax.ShapeDtypeStruct((b_pad, N), jnp.float32),  # decoder out
                   jax.ShapeDtypeStruct((b_pad, L), jnp.float32)), # encoder h
        grid=grid,
        in_specs=[act_spec(N), act_spec(half),
                  resident(w1.shape), resident(b1.shape),
                  resident(w2.shape), resident(b2.shape),
                  resident(w3.shape), resident(b3.shape),
                  resident(w4.shape), resident(b4.shape)],
        out_specs=(act_spec(N), act_spec(L)),
        compiler_params=pltpu.CompilerParams(
            dimension_semantics=("parallel",),      # megacore-shard batch tiles
            vmem_limit_bytes=32 * 1024 * 1024),     # explicit budget (v5e default=16MiB)
    )(x, eps, w1, b1, w2, b2, w3, b3, w4, b4)

    out = out[:B]
    h = h[:B]
    # mu/logvar split done in the wrapper (keeps kernel stores full-width).
    return out, h[:, :half], h[:, half:]


def xavier_uniform_bf16(key, fan_in, fan_out):
    """torch.nn.init.xavier_uniform_ equivalent, stored (in, out) in bf16."""
    bound = float(np.sqrt(6.0 / (fan_in + fan_out)))
    w = jax.random.uniform(key, (fan_in, fan_out), jnp.float32,
                           minval=-bound, maxval=bound)
    return w.astype(jnp.bfloat16)


def make_params(key, p_dims):
    """Build MultiVAE params from p_dims = [L, H, N] (matching model2.py)."""
    q_dims = p_dims[::-1]                     # [N, H, L]
    p_dims = list(p_dims)
    p_dims[0] = q_dims[-1] // 2               # [L//2, H, N]
    # NOTE: assumes q_dims[-1] (L) is even, matching model2.py's integer // 2 split.

    keys = jax.random.split(key, 4)
    # encoder: Linear(N,H), Linear(H,L)
    w1 = xavier_uniform_bf16(keys[0], q_dims[0], q_dims[1])
    b1 = jnp.full((1, q_dims[1]), 0.01, jnp.float32)
    w2 = xavier_uniform_bf16(keys[1], q_dims[1], q_dims[2])
    b2 = jnp.full((1, q_dims[2]), 0.01, jnp.float32)
    # decoder: Linear(L//2,H), Linear(H,N)
    w3 = xavier_uniform_bf16(keys[2], p_dims[0], p_dims[1])
    b3 = jnp.full((1, p_dims[1]), 0.01, jnp.float32)
    w4 = xavier_uniform_bf16(keys[3], p_dims[1], p_dims[2])
    b4 = jnp.full((1, p_dims[2]), 0.01, jnp.float32)
    return (w1, b1, w2, b2, w3, b3, w4, b4)


def multivae_ref(x, params, eps):
    """Pure-JAX reference with the same bf16-matmul / f32-accumulate arithmetic."""
    w1, b1, w2, b2, w3, b3, w4, b4 = params
    f32 = jnp.float32
    h1 = jnp.tanh(jnp.dot(x.astype(jnp.bfloat16), w1, preferred_element_type=f32) + b1)
    h = jnp.dot(h1.astype(jnp.bfloat16), w2, preferred_element_type=f32) + b2
    half = w3.shape[0]
    mu, logvar = h[:, :half], h[:, half:]
    z = mu + eps * jnp.exp(0.5 * logvar)
    d1 = jnp.tanh(jnp.dot(z.astype(jnp.bfloat16), w3, preferred_element_type=f32) + b3)
    out = jnp.dot(d1.astype(jnp.bfloat16), w4, preferred_element_type=f32) + b4
    return out, mu, logvar


if __name__ == "__main__":
    # p_dims = [latent=16, hidden=32, n_items=64]; batch=256 -> 2 batch tiles of 128.
    p_dims = [16, 32, 64]
    B, N, L = 256, p_dims[-1], p_dims[0]

    key = jax.random.PRNGKey(0)
    k_x, k_eps, k_p = jax.random.split(key, 3)

    x = jax.random.uniform(k_x, (B, N), jnp.float32)          # e.g. click counts
    params = make_params(k_p, p_dims)
    # training-mode reparameterization noise, eps ~ N(0, std=0.01)
    eps = 0.01 * jax.random.normal(k_eps, (B, L // 2), jnp.float32)

    out, mu, logvar = multivae_forward(x, params, eps)
    jax.block_until_ready((out, mu, logvar))

    ref_out, ref_mu, ref_logvar = multivae_ref(x, params, eps)
    assert out.shape == (B, N)
    assert mu.shape == (B, L // 2) and logvar.shape == (B, L - L // 2)
    # bf16 matmul inputs (f32 accumulate) on both paths -> loose-ish tolerance.
    np.testing.assert_allclose(np.asarray(out), np.asarray(ref_out), rtol=2e-2, atol=2e-2)
    np.testing.assert_allclose(np.asarray(mu), np.asarray(ref_mu), rtol=2e-2, atol=2e-2)
    np.testing.assert_allclose(np.asarray(logvar), np.asarray(ref_logvar), rtol=2e-2, atol=2e-2)

    print("KERNEL_OK")
</pallas_src>

<mosaic_0001>
module attributes {stable_mosaic.version = 11 : i64} {
  func.func @multivae_kernel(%arg0: i32, %arg1: memref<128x64xf32, #tpu.memory_space<vmem>>, %arg2: memref<128x8xf32, #tpu.memory_space<vmem>>, %arg3: memref<64x32xbf16, #tpu.memory_space<vmem>>, %arg4: memref<1x32xf32, #tpu.memory_space<vmem>>, %arg5: memref<32x16xbf16, #tpu.memory_space<vmem>>, %arg6: memref<1x16xf32, #tpu.memory_space<vmem>>, %arg7: memref<8x32xbf16, #tpu.memory_space<vmem>>, %arg8: memref<1x32xf32, #tpu.memory_space<vmem>>, %arg9: memref<32x64xbf16, #tpu.memory_space<vmem>>, %arg10: memref<1x64xf32, #tpu.memory_space<vmem>>, %arg11: memref<128x64xf32, #tpu.memory_space<vmem>>, %arg12: memref<128x16xf32, #tpu.memory_space<vmem>>) attributes {dimension_semantics = [#tpu.dimension_semantics<parallel>], iteration_bounds = array<i64: 2>, scalar_prefetch = 0 : i64, scratch_operands = 0 : i64, tpu.core_type = #tpu.core_type<tc>, window_params = [{transform_indices = @transform_0, window_bounds = array<i64: 128, 64>}, {transform_indices = @transform_1, window_bounds = array<i64: 128, 8>}, {pipeline_mode = #tpu.pipeline_mode<synchronous>, transform_indices = @transform_2, window_bounds = array<i64: 64, 32>}, {pipeline_mode = #tpu.pipeline_mode<synchronous>, transform_indices = @transform_3, window_bounds = array<i64: 1, 32>}, {pipeline_mode = #tpu.pipeline_mode<synchronous>, transform_indices = @transform_4, window_bounds = array<i64: 32, 16>}, {pipeline_mode = #tpu.pipeline_mode<synchronous>, transform_indices = @transform_5, window_bounds = array<i64: 1, 16>}, {pipeline_mode = #tpu.pipeline_mode<synchronous>, transform_indices = @transform_6, window_bounds = array<i64: 8, 32>}, {pipeline_mode = #tpu.pipeline_mode<synchronous>, transform_indices = @transform_7, window_bounds = array<i64: 1, 32>}, {pipeline_mode = #tpu.pipeline_mode<synchronous>, transform_indices = @transform_8, window_bounds = array<i64: 32, 64>}, {pipeline_mode = #tpu.pipeline_mode<synchronous>, transform_indices = @transform_9, window_bounds = array<i64: 1, 64>}, {transform_indices = @transform_10, window_bounds = array<i64: 128, 64>}, {transform_indices = @transform_11, window_bounds = array<i64: 128, 16>}]} {
    %c0 = arith.constant 0 : index
    %c0_0 = arith.constant 0 : index
    %0 = vector.load %arg1[%c0, %c0_0] : memref<128x64xf32, #tpu.memory_space<vmem>>, vector<128x64xf32>
    %1 = arith.truncf %0 : vector<128x64xf32> to vector<128x64xbf16>
    %c0_1 = arith.constant 0 : index
    %c0_2 = arith.constant 0 : index
    %2 = vector.load %arg3[%c0_1, %c0_2] : memref<64x32xbf16, #tpu.memory_space<vmem>>, vector<64x32xbf16>
    %cst = arith.constant dense<0.000000e+00> : vector<128x32xf32>
    %3 = tpu.matmul %1, %2, %cst {dimension_numbers = #tpu.dot_dimension_numbers<[1], [0], [0], [1], [0, 0, 1, 1], [], []>} : vector<128x64xbf16>, vector<64x32xbf16>, vector<128x32xf32> -> vector<128x32xf32>
    %c0_3 = arith.constant 0 : index
    %c0_4 = arith.constant 0 : index
    %4 = vector.load %arg4[%c0_3, %c0_4] : memref<1x32xf32, #tpu.memory_space<vmem>>, vector<1x32xf32>
    %5 = vector.broadcast %4 : vector<1x32xf32> to vector<128x32xf32>
    %6 = arith.addf %3, %5 : vector<128x32xf32>
    %7 = math.tanh %6 : vector<128x32xf32>
    %8 = arith.truncf %7 : vector<128x32xf32> to vector<128x32xbf16>
    %c0_5 = arith.constant 0 : index
    %c0_6 = arith.constant 0 : index
    %9 = vector.load %arg5[%c0_5, %c0_6] : memref<32x16xbf16, #tpu.memory_space<vmem>>, vector<32x16xbf16>
    %cst_7 = arith.constant dense<0.000000e+00> : vector<128x16xf32>
    %10 = tpu.matmul %8, %9, %cst_7 {dimension_numbers = #tpu.dot_dimension_numbers<[1], [0], [0], [1], [0, 0, 1, 1], [], []>} : vector<128x32xbf16>, vector<32x16xbf16>, vector<128x16xf32> -> vector<128x16xf32>
    %c0_8 = arith.constant 0 : index
    %c0_9 = arith.constant 0 : index
    %11 = vector.load %arg6[%c0_8, %c0_9] : memref<1x16xf32, #tpu.memory_space<vmem>>, vector<1x16xf32>
    %12 = vector.broadcast %11 : vector<1x16xf32> to vector<128x16xf32>
    %13 = arith.addf %10, %12 : vector<128x16xf32>
    %14 = vector.extract_strided_slice %13 {offsets = [0, 0], sizes = [128, 8], strides = [1, 1]} : vector<128x16xf32> to vector<128x8xf32>
    %15 = vector.extract_strided_slice %13 {offsets = [0, 8], sizes = [128, 8], strides = [1, 1]} : vector<128x16xf32> to vector<128x8xf32>
    %c0_10 = arith.constant 0 : index
    %c0_11 = arith.constant 0 : index
    %16 = vector.load %arg2[%c0_10, %c0_11] : memref<128x8xf32, #tpu.memory_space<vmem>>, vector<128x8xf32>
    %cst_12 = arith.constant 5.000000e-01 : f32
    %17 = vector.broadcast %cst_12 : f32 to vector<128x8xf32>
    %18 = arith.mulf %17, %15 : vector<128x8xf32>
    %19 = math.exp %18 : vector<128x8xf32>
    %20 = arith.mulf %16, %19 : vector<128x8xf32>
    %21 = arith.addf %14, %20 : vector<128x8xf32>
    %22 = arith.truncf %21 : vector<128x8xf32> to vector<128x8xbf16>
    %c0_13 = arith.constant 0 : index
    %c0_14 = arith.constant 0 : index
    %23 = vector.load %arg7[%c0_13, %c0_14] : memref<8x32xbf16, #tpu.memory_space<vmem>>, vector<8x32xbf16>
    %cst_15 = arith.constant dense<0.000000e+00> : vector<128x32xf32>
    %24 = tpu.matmul %22, %23, %cst_15 {dimension_numbers = #tpu.dot_dimension_numbers<[1], [0], [0], [1], [0, 0, 1, 1], [], []>} : vector<128x8xbf16>, vector<8x32xbf16>, vector<128x32xf32> -> vector<128x32xf32>
    %c0_16 = arith.constant 0 : index
    %c0_17 = arith.constant 0 : index
    %25 = vector.load %arg8[%c0_16, %c0_17] : memref<1x32xf32, #tpu.memory_space<vmem>>, vector<1x32xf32>
    %26 = vector.broadcast %25 : vector<1x32xf32> to vector<128x32xf32>
    %27 = arith.addf %24, %26 : vector<128x32xf32>
    %28 = math.tanh %27 : vector<128x32xf32>
    %29 = arith.truncf %28 : vector<128x32xf32> to vector<128x32xbf16>
    %c0_18 = arith.constant 0 : index
    %c0_19 = arith.constant 0 : index
    %30 = vector.load %arg9[%c0_18, %c0_19] : memref<32x64xbf16, #tpu.memory_space<vmem>>, vector<32x64xbf16>
    %cst_20 = arith.constant dense<0.000000e+00> : vector<128x64xf32>
    %31 = tpu.matmul %29, %30, %cst_20 {dimension_numbers = #tpu.dot_dimension_numbers<[1], [0], [0], [1], [0, 0, 1, 1], [], []>} : vector<128x32xbf16>, vector<32x64xbf16>, vector<128x64xf32> -> vector<128x64xf32>
    %c0_21 = arith.constant 0 : index
    %c0_22 = arith.constant 0 : index
    %32 = vector.load %arg10[%c0_21, %c0_22] : memref<1x64xf32, #tpu.memory_space<vmem>>, vector<1x64xf32>
    %33 = vector.broadcast %32 : vector<1x64xf32> to vector<128x64xf32>
    %34 = arith.addf %31, %33 : vector<128x64xf32>
    %c0_23 = arith.constant 0 : index
    %c0_24 = arith.constant 0 : index
    %35 = vector.load %arg11[%c0_23, %c0_24] : memref<128x64xf32, #tpu.memory_space<vmem>>, vector<128x64xf32>
    tpu.vector_store %arg11[%c0_23, %c0_24], %34 {strides = array<i32>} : memref<128x64xf32, #tpu.memory_space<vmem>>, vector<128x64xf32>,
    %c0_25 = arith.constant 0 : index
    %c0_26 = arith.constant 0 : index
    %36 = vector.load %arg12[%c0_25, %c0_26] : memref<128x16xf32, #tpu.memory_space<vmem>>, vector<128x16xf32>
    tpu.vector_store %arg12[%c0_25, %c0_26], %13 {strides = array<i32>} : memref<128x16xf32, #tpu.memory_space<vmem>>, vector<128x16xf32>,
    return
  }
  func.func @transform_0(%arg0: i32) -> (i32, i32) {
    %c0_i32 = arith.constant 0 : i32
    %c0_i32_0 = arith.constant 0 : i32
    return %arg0, %c0_i32 : i32, i32
  }
  func.func @transform_1(%arg0: i32) -> (i32, i32) {
    %c0_i32 = arith.constant 0 : i32
    %c0_i32_0 = arith.constant 0 : i32
    return %arg0, %c0_i32 : i32, i32
  }
  func.func @transform_2(%arg0: i32) -> (i32, i32) {
    %c0_i32 = arith.constant 0 : i32
    %c0_i32_0 = arith.constant 0 : i32
    %c0_i32_1 = arith.constant 0 : i32
    return %c0_i32, %c0_i32_0 : i32, i32
  }
  func.func @transform_3(%arg0: i32) -> (i32, i32) {
    %c0_i32 = arith.constant 0 : i32
    %c0_i32_0 = arith.constant 0 : i32
    %c0_i32_1 = arith.constant 0 : i32
    return %c0_i32, %c0_i32_0 : i32, i32
  }
  func.func @transform_4(%arg0: i32) -> (i32, i32) {
    %c0_i32 = arith.constant 0 : i32
    %c0_i32_0 = arith.constant 0 : i32
    %c0_i32_1 = arith.constant 0 : i32
    return %c0_i32, %c0_i32_0 : i32, i32
  }
  func.func @transform_5(%arg0: i32) -> (i32, i32) {
    %c0_i32 = arith.constant 0 : i32
    %c0_i32_0 = arith.constant 0 : i32
    %c0_i32_1 = arith.constant 0 : i32
    return %c0_i32, %c0_i32_0 : i32, i32
  }
  func.func @transform_6(%arg0: i32) -> (i32, i32) {
    %c0_i32 = arith.constant 0 : i32
    %c0_i32_0 = arith.constant 0 : i32
    %c0_i32_1 = arith.constant 0 : i32
    return %c0_i32, %c0_i32_0 : i32, i32
  }
  func.func @transform_7(%arg0: i32) -> (i32, i32) {
    %c0_i32 = arith.constant 0 : i32
    %c0_i32_0 = arith.constant 0 : i32
    %c0_i32_1 = arith.constant 0 : i32
    return %c0_i32, %c0_i32_0 : i32, i32
  }
  func.func @transform_8(%arg0: i32) -> (i32, i32) {
    %c0_i32 = arith.constant 0 : i32
    %c0_i32_0 = arith.constant 0 : i32
    %c0_i32_1 = arith.constant 0 : i32
    return %c0_i32, %c0_i32_0 : i32, i32
  }
  func.func @transform_9(%arg0: i32) -> (i32, i32) {
    %c0_i32 = arith.constant 0 : i32
    %c0_i32_0 = arith.constant 0 : i32
    %c0_i32_1 = arith.constant 0 : i32
    return %c0_i32, %c0_i32_0 : i32, i32
  }
  func.func @transform_10(%arg0: i32) -> (i32, i32) {
    %c0_i32 = arith.constant 0 : i32
    %c0_i32_0 = arith.constant 0 : i32
    return %arg0, %c0_i32 : i32, i32
  }
  func.func @transform_11(%arg0: i32) -> (i32, i32) {
    %c0_i32 = arith.constant 0 : i32
    %c0_i32_0 = arith.constant 0 : i32
    return %arg0, %c0_i32 : i32, i32
  }
}

</mosaic_0001>

<llo_original>
// kernel: tpu_custom_call.1
$region0: #{tpu_custom_call.1}
  #allocation0 [shape = 'u32[]', space=smem, size = 0x4, offset = 0x4, fixed_abs, tag = 'smem constant byte address 0x4 - core index']
  #allocation1 [shape = 'u32[72,128]{1,0:T(1,128)}', space=vmem, size = 0x9000, scoped, tag = 'internal scratch']
  %s0 = inlined_call_operand.vmem [shape: f32[256,64], index: 0, kind: input, shape index: {}]
  %s1 = inlined_call_operand.vmem [shape: f32[256,8], index: 1, kind: input, shape index: {}]
  %s2 = inlined_call_operand.vmem [shape: bf16[64,32], index: 2, kind: input, shape index: {}]
  %s3 = inlined_call_operand.vmem [shape: f32[1,32], index: 3, kind: input, shape index: {}]
  %s4 = inlined_call_operand.vmem [shape: bf16[32,16], index: 4, kind: input, shape index: {}]
  %s5 = inlined_call_operand.vmem [shape: f32[1,16], index: 5, kind: input, shape index: {}]
  %s6 = inlined_call_operand.vmem [shape: bf16[8,32], index: 6, kind: input, shape index: {}]
  %s7 = inlined_call_operand.vmem [shape: f32[1,32], index: 7, kind: input, shape index: {}]
  %s8 = inlined_call_operand.vmem [shape: bf16[32,64], index: 8, kind: input, shape index: {}]
  %s9 = inlined_call_operand.vmem [shape: f32[1,64], index: 9, kind: input, shape index: {}]
  %s10 = inlined_call_operand.vmem [shape: f32[256,64], index: 10, kind: output, shape index: {0}]
  %s11 = inlined_call_operand.vmem [shape: f32[256,16], index: 11, kind: output, shape index: {1}]
  %12 = xla_tuple %s10, %s11
  %s13 = sld [smem:[#allocation0]]
  $region81: #{tpu_custom_call.1} parent=0
    _
  %s15 = ssub.s32 1, %s13
  %s16 = scalar_select 0, %s15, %s13
  loop: start=0, step=1, limit=4
  $region2: #{tpu_custom_call.1} parent=0 // loop_pre_header
    _
  $region3: #{tpu_custom_call.1} parent=0 // loop_header
    %s18 = sphi 0, %s22
    %p19 = scmp.ge.s32.totalorder %s18, 4
    %s28 = sphi 0, %s30
    %s31 = sphi 0, %s28
    %s32 = sphi 0, %s31
    %s48 = sphi 0, %s32
    %s54 = sphi 0, %s56
    %s57 = sphi 0, %s54
    %s58 = sphi 0, %s57
    %s74 = sphi 0, %s58
    %s78 = sphi 0, %s78
    %s80 = sphi 0, %s78
    %s81 = sphi 0, %s80
    %s95 = sphi 0, %s81
    %s99 = sphi 0, %s99
    %s101 = sphi 0, %s99
    %s102 = sphi 0, %s101
    %s116 = sphi 0, %s102
    %s120 = sphi 0, %s120
    %s122 = sphi 0, %s120
    %s123 = sphi 0, %s122
    %s137 = sphi 0, %s123
    %s141 = sphi 0, %s141
    %s143 = sphi 0, %s141
    %s144 = sphi 0, %s143
    %s158 = sphi 0, %s144
    %s162 = sphi 0, %s162
    %s164 = sphi 0, %s162
    %s165 = sphi 0, %s164
    %s179 = sphi 0, %s165
    %s183 = sphi 0, %s183
    %s185 = sphi 0, %s183
    %s186 = sphi 0, %s185
    %s200 = sphi 0, %s186
    %s204 = sphi 0, %s204
    %s206 = sphi 0, %s204
    %s207 = sphi 0, %s206
    %s221 = sphi 0, %s207
    %s225 = sphi 0, %s225
    %s227 = sphi 0, %s225
    %s228 = sphi 0, %s227
    %s242 = sphi 0, %s228
    %s248 = sphi 0, %s250
    %s251 = sphi 0, %s248
    %s252 = sphi 0, %s251
    %s268 = sphi 0, %s252
    %s274 = sphi 0, %s276
    %s277 = sphi 0, %s274
    %s278 = sphi 0, %s277
    %s294 = sphi 0, %s278
  $region4: #{tpu_custom_call.1} parent=0 // loop_header_branch
    %21 = sbr.rel (%p19) target = $region8
  $region5: #{tpu_custom_call.1} parent=0 // loop_body
    %s23 = ssub.s32 %s18, 1
    %s24 = ssub.s32 %s18, 2
    %s25 = sadd.s32 %s18, 1
    %s26 = ssub.s32 %s18, %s25
    %p27 = scmp.eq.s32.totalorder %s26, 0
    %s29 = sadd.s32 %s28, 1
    %s30 = scalar_select %p27, %s28, %s29
    %p33 = pneg %p27
    %p34 = scmp.eq.s32.totalorder %s18, 1
    %p35 = por %p33, %p34
    %p36 = scmp.ne.s32.totalorder %s28, %s31
    %p37 = scmp.eq.s32.totalorder %s18, 0
    %p38 = por %p36, %p37
    %p39 = scmp.ne.s32.totalorder %s28, %s31
    %p40 = scmp.eq.s32.totalorder %s23, 1
    %p41 = por %p39, %p40
    %p42 = scmp.ne.s32.totalorder %s31, %s32
    %p43 = scmp.eq.s32.totalorder %s23, 0
    %p44 = por %p42, %p43
    %p45 = scmp.ne.s32.totalorder %s31, %s32
    %p46 = scmp.eq.s32.totalorder %s24, 1
    %p47 = por %p45, %p46
    %p49 = scmp.ne.s32.totalorder %s32, %s48
    %p50 = scmp.eq.s32.totalorder %s24, 0
    %p51 = por %p49, %p50
    %s52 = ssub.s32 %s18, %s25
    %p53 = scmp.eq.s32.totalorder %s52, 0
    %s55 = sadd.s32 %s54, 1
    %s56 = scalar_select %p53, %s54, %s55
    %p59 = pneg %p53
    %p60 = scmp.eq.s32.totalorder %s18, 1
    %p61 = por %p59, %p60
    %p62 = scmp.ne.s32.totalorder %s54, %s57
    %p63 = scmp.eq.s32.totalorder %s18, 0
    %p64 = por %p62, %p63
    %p65 = scmp.ne.s32.totalorder %s54, %s57
    %p66 = scmp.eq.s32.totalorder %s23, 1
    %p67 = por %p65, %p66
    %p68 = scmp.ne.s32.totalorder %s57, %s58
    %p69 = scmp.eq.s32.totalorder %s23, 0
    %p70 = por %p68, %p69
    %p71 = scmp.ne.s32.totalorder %s57, %s58
    %p72 = scmp.eq.s32.totalorder %s24, 1
    %p73 = por %p71, %p72
    %p75 = scmp.ne.s32.totalorder %s58, %s74
    %p76 = scmp.eq.s32.totalorder %s24, 0
    %p77 = por %p75, %p76
    %s79 = sadd.s32 %s78, 1
    %p82 = scmp.eq.s32.totalorder %s18, 1
    %p83 = scmp.ne.s32.totalorder %s78, %s80
    %p84 = scmp.eq.s32.totalorder %s18, 0
    %p85 = por %p83, %p84
    %p86 = scmp.ne.s32.totalorder %s78, %s80
    %p87 = scmp.eq.s32.totalorder %s23, 1
    %p88 = por %p86, %p87
    %p89 = scmp.ne.s32.totalorder %s80, %s81
    %p90 = scmp.eq.s32.totalorder %s23, 0
    %p91 = por %p89, %p90
    %p92 = scmp.ne.s32.totalorder %s80, %s81
    %p93 = scmp.eq.s32.totalorder %s24, 1
    %p94 = por %p92, %p93
    %p96 = scmp.ne.s32.totalorder %s81, %s95
    %p97 = scmp.eq.s32.totalorder %s24, 0
    %p98 = por %p96, %p97
    %s100 = sadd.s32 %s99, 1
    %p103 = scmp.eq.s32.totalorder %s18, 1
    %p104 = scmp.ne.s32.totalorder %s99, %s101
    %p105 = scmp.eq.s32.totalorder %s18, 0
    %p106 = por %p104, %p105
    %p107 = scmp.ne.s32.totalorder %s99, %s101
    %p108 = scmp.eq.s32.totalorder %s23, 1
    %p109 = por %p107, %p108
    %p110 = scmp.ne.s32.totalorder %s101, %s102
    %p111 = scmp.eq.s32.totalorder %s23, 0
    %p112 = por %p110, %p111
    %p113 = scmp.ne.s32.totalorder %s101, %s102
    %p114 = scmp.eq.s32.totalorder %s24, 1
    %p115 = por %p113, %p114
    %p117 = scmp.ne.s32.totalorder %s102, %s116
    %p118 = scmp.eq.s32.totalorder %s24, 0
    %p119 = por %p117, %p118
    %s121 = sadd.s32 %s120, 1
    %p124 = scmp.eq.s32.totalorder %s18, 1
    %p125 = scmp.ne.s32.totalorder %s120, %s122
    %p126 = scmp.eq.s32.totalorder %s18, 0
    %p127 = por %p125, %p126
    %p128 = scmp.ne.s32.totalorder %s120, %s122
    %p129 = scmp.eq.s32.totalorder %s23, 1
    %p130 = por %p128, %p129
    %p131 = scmp.ne.s32.totalorder %s122, %s123
    %p132 = scmp.eq.s32.totalorder %s23, 0
    %p133 = por %p131, %p132
    %p134 = scmp.ne.s32.totalorder %s122, %s123
    %p135 = scmp.eq.s32.totalorder %s24, 1
    %p136 = por %p134, %p135
    %p138 = scmp.ne.s32.totalorder %s123, %s137
    %p139 = scmp.eq.s32.totalorder %s24, 0
    %p140 = por %p138, %p139
    %s142 = sadd.s32 %s141, 1
    %p145 = scmp.eq.s32.totalorder %s18, 1
    %p146 = scmp.ne.s32.totalorder %s141, %s143
    %p147 = scmp.eq.s32.totalorder %s18, 0
    %p148 = por %p146, %p147
    %p149 = scmp.ne.s32.totalorder %s141, %s143
    %p150 = scmp.eq.s32.totalorder %s23, 1
    %p151 = por %p149, %p150
    %p152 = scmp.ne.s32.totalorder %s143, %s144
    %p153 = scmp.eq.s32.totalorder %s23, 0
    %p154 = por %p152, %p153
    %p155 = scmp.ne.s32.totalorder %s143, %s144
    %p156 = scmp.eq.s32.totalorder %s24, 1
    %p157 = por %p155, %p156
    %p159 = scmp.ne.s32.totalorder %s144, %s158
    %p160 = scmp.eq.s32.totalorder %s24, 0
    %p161 = por %p159, %p160
    %s163 = sadd.s32 %s162, 1
    %p166 = scmp.eq.s32.totalorder %s18, 1
    %p167 = scmp.ne.s32.totalorder %s162, %s164
    %p168 = scmp.eq.s32.totalorder %s18, 0
    %p169 = por %p167, %p168
    %p170 = scmp.ne.s32.totalorder %s162, %s164
    %p171 = scmp.eq.s32.totalorder %s23, 1
    %p172 = por %p170, %p171
    %p173 = scmp.ne.s32.totalorder %s164, %s165
    %p174 = scmp.eq.s32.totalorder %s23, 0
    %p175 = por %p173, %p174
    %p176 = scmp.ne.s32.totalorder %s164, %s165
    %p177 = scmp.eq.s32.totalorder %s24, 1
    %p178 = por %p176, %p177
    %p180 = scmp.ne.s32.totalorder %s165, %s179
    %p181 = scmp.eq.s32.totalorder %s24, 0
    %p182 = por %p180, %p181
    %s184 = sadd.s32 %s183, 1
    %p187 = scmp.eq.s32.totalorder %s18, 1
    %p188 = scmp.ne.s32.totalorder %s183, %s185
    %p189 = scmp.eq.s32.totalorder %s18, 0
    %p190 = por %p188, %p189
    %p191 = scmp.ne.s32.totalorder %s183, %s185
    %p192 = scmp.eq.s32.totalorder %s23, 1
    %p193 = por %p191, %p192
    %p194 = scmp.ne.s32.totalorder %s185, %s186
    %p195 = scmp.eq.s32.totalorder %s23, 0
    %p196 = por %p194, %p195
    %p197 = scmp.ne.s32.totalorder %s185, %s186
    %p198 = scmp.eq.s32.totalorder %s24, 1
    %p199 = por %p197, %p198
    %p201 = scmp.ne.s32.totalorder %s186, %s200
    %p202 = scmp.eq.s32.totalorder %s24, 0
    %p203 = por %p201, %p202
    %s205 = sadd.s32 %s204, 1
    %p208 = scmp.eq.s32.totalorder %s18, 1
    %p209 = scmp.ne.s32.totalorder %s204, %s206
    %p210 = scmp.eq.s32.totalorder %s18, 0
    %p211 = por %p209, %p210
    %p212 = scmp.ne.s32.totalorder %s204, %s206
    %p213 = scmp.eq.s32.totalorder %s23, 1
    %p214 = por %p212, %p213
    %p215 = scmp.ne.s32.totalorder %s206, %s207
    %p216 = scmp.eq.s32.totalorder %s23, 0
    %p217 = por %p215, %p216
    %p218 = scmp.ne.s32.totalorder %s206, %s207
    %p219 = scmp.eq.s32.totalorder %s24, 1
    %p220 = por %p218, %p219
    %p222 = scmp.ne.s32.totalorder %s207, %s221
    %p223 = scmp.eq.s32.totalorder %s24, 0
    %p224 = por %p222, %p223
    %s226 = sadd.s32 %s225, 1
    %p229 = scmp.eq.s32.totalorder %s18, 1
    %p230 = scmp.ne.s32.totalorder %s225, %s227
    %p231 = scmp.eq.s32.totalorder %s18, 0
    %p232 = por %p230, %p231
    %p233 = scmp.ne.s32.totalorder %s225, %s227
    %p234 = scmp.eq.s32.totalorder %s23, 1
    %p235 = por %p233, %p234
    %p236 = scmp.ne.s32.totalorder %s227, %s228
    %p237 = scmp.eq.s32.totalorder %s23, 0
    %p238 = por %p236, %p237
    %p239 = scmp.ne.s32.totalorder %s227, %s228
    %p240 = scmp.eq.s32.totalorder %s24, 1
    %p241 = por %p239, %p240
    %p243 = scmp.ne.s32.totalorder %s228, %s242
    %p244 = scmp.eq.s32.totalorder %s24, 0
    %p245 = por %p243, %p244
    %s246 = ssub.s32 %s18, %s25
    %p247 = scmp.eq.s32.totalorder %s246, 0
    %s249 = sadd.s32 %s248, 1
    %s250 = scalar_select %p247, %s248, %s249
    %p253 = pneg %p247
    %p254 = scmp.eq.s32.totalorder %s18, 1
    %p255 = por %p253, %p254
    %p256 = scmp.ne.s32.totalorder %s248, %s251
    %p257 = scmp.eq.s32.totalorder %s18, 0
    %p258 = por %p256, %p257
    %p259 = scmp.ne.s32.totalorder %s248, %s251
    %p260 = scmp.eq.s32.totalorder %s23, 1
    %p261 = por %p259, %p260
    %p262 = scmp.ne.s32.totalorder %s251, %s252
    %p263 = scmp.eq.s32.totalorder %s23, 0
    %p264 = por %p262, %p263
    %p265 = scmp.ne.s32.totalorder %s251, %s252
    %p266 = scmp.eq.s32.totalorder %s24, 1
    %p267 = por %p265, %p266
    %p269 = scmp.ne.s32.totalorder %s252, %s268
    %p270 = scmp.eq.s32.totalorder %s24, 0
    %p271 = por %p269, %p270
    %s272 = ssub.s32 %s18, %s25
    %p273 = scmp.eq.s32.totalorder %s272, 0
    %s275 = sadd.s32 %s274, 1
    %s276 = scalar_select %p273, %s274, %s275
    %p279 = pneg %p273
    %p280 = scmp.eq.s32.totalorder %s18, 1
    %p281 = por %p279, %p280
    %p282 = scmp.ne.s32.totalorder %s274, %s277
    %p283 = scmp.eq.s32.totalorder %s18, 0
    %p284 = por %p282, %p283
    %p285 = scmp.ne.s32.totalorder %s274, %s277
    %p286 = scmp.eq.s32.totalorder %s23, 1
    %p287 = por %p285, %p286
    %p288 = scmp.ne.s32.totalorder %s277, %s278
    %p289 = scmp.eq.s32.totalorder %s23, 0
    %p290 = por %p288, %p289
    %p291 = scmp.ne.s32.totalorder %s277, %s278
    %p292 = scmp.eq.s32.totalorder %s24, 1
    %p293 = por %p291, %p292
    %p295 = scmp.ne.s32.totalorder %s278, %s294
    %p296 = scmp.eq.s32.totalorder %s24, 0
    %p297 = por %p295, %p296
    %p298 = scmp.le.s32.totalorder 1, %s18
    %p299 = scmp.lt.s32.totalorder %s18, 3
    %p300 = pnand %p298, %p299
    %p301 = pneg %p300
    // Predicated region
    $region9: #{tpu_custom_call.1} parent=5 // pred_check
      _
    $region10: #{tpu_custom_call.1} parent=5 // pred_check_branch
      %303 = sbr.rel (%p300) target = $region12
    $region11: #{tpu_custom_call.1} parent=5 // pred_region
      %s304 = ssub.s32 %s18, 1
      // Predicated region
      $region13: #{tpu_custom_call.1} parent=11 // pred_check
        %p305 = pneg %p91
      $region14: #{tpu_custom_call.1} parent=11 // pred_check_branch
        %307 = sbr.rel (%p305) target = $region16
      $region15: #{tpu_custom_call.1} parent=11 // pred_region
        _
      $region16: #{tpu_custom_call.1} parent=11 // pred_fallthru
        _
      // Predicated region
      $region17: #{tpu_custom_call.1} parent=11 // pred_check
        %p308 = pneg %p112
      $region18: #{tpu_custom_call.1} parent=11 // pred_check_branch
        %310 = sbr.rel (%p308) target = $region20
      $region19: #{tpu_custom_call.1} parent=11 // pred_region
        _
      $region20: #{tpu_custom_call.1} parent=11 // pred_fallthru
        _
      // Predicated region
      $region21: #{tpu_custom_call.1} parent=11 // pred_check
        %p311 = pneg %p133
      $region22: #{tpu_custom_call.1} parent=11 // pred_check_branch
        %313 = sbr.rel (%p311) target = $region24
      $region23: #{tpu_custom_call.1} parent=11 // pred_region
        _
      $region24: #{tpu_custom_call.1} parent=11 // pred_fallthru
        _
      // Predicated region
      $region25: #{tpu_custom_call.1} parent=11 // pred_check
        %p314 = pneg %p154
      $region26: #{tpu_custom_call.1} parent=11 // pred_check_branch
        %316 = sbr.rel (%p314) target = $region28
      $region27: #{tpu_custom_call.1} parent=11 // pred_region
        _
      $region28: #{tpu_custom_call.1} parent=11 // pred_fallthru
        _
      // Predicated region
      $region29: #{tpu_custom_call.1} parent=11 // pred_check
        %p317 = pneg %p175
      $region30: #{tpu_custom_call.1} parent=11 // pred_check_branch
        %319 = sbr.rel (%p317) target = $region32
      $region31: #{tpu_custom_call.1} parent=11 // pred_region
        _
      $region32: #{tpu_custom_call.1} parent=11 // pred_fallthru
        _
      // Predicated region
      $region33: #{tpu_custom_call.1} parent=11 // pred_check
        %p320 = pneg %p196
      $region34: #{tpu_custom_call.1} parent=11 // pred_check_branch
        %322 = sbr.rel (%p320) target = $region36
      $region35: #{tpu_custom_call.1} parent=11 // pred_region
        _
      $region36: #{tpu_custom_call.1} parent=11 // pred_fallthru
        _
      // Predicated region
      $region37: #{tpu_custom_call.1} parent=11 // pred_check
        %p323 = pneg %p217
      $region38: #{tpu_custom_call.1} parent=11 // pred_check_branch
        %325 = sbr.rel (%p323) target = $region40
      $region39: #{tpu_custom_call.1} parent=11 // pred_region
        _
      $region40: #{tpu_custom_call.1} parent=11 // pred_fallthru
        _
      // Predicated region
      $region41: #{tpu_custom_call.1} parent=11 // pred_check
        %p326 = pneg %p238
      $region42: #{tpu_custom_call.1} parent=11 // pred_check_branch
        %328 = sbr.rel (%p326) target = $region44
      $region43: #{tpu_custom_call.1} parent=11 // pred_region
        _
      $region44: #{tpu_custom_call.1} parent=11 // pred_fallthru
        _
    $region12: #{tpu_custom_call.1} parent=5 // pred_fallthru
      _
    %p329 = scmp.lt.s32.totalorder %s18, 2
    // Predicated region
    $region45: #{tpu_custom_call.1} parent=5 // pred_check
      %p330 = pneg %p329
    $region46: #{tpu_custom_call.1} parent=5 // pred_check_branch
      %332 = sbr.rel (%p330) target = $region48
    $region47: #{tpu_custom_call.1} parent=5 // pred_region
      // Predicated region
      $region49: #{tpu_custom_call.1} parent=47 // pred_check
        %p333 = pneg %p38
      $region50: #{tpu_custom_call.1} parent=47 // pred_check_branch
        %335 = sbr.rel (%p333) target = $region52
      $region51: #{tpu_custom_call.1} parent=47 // pred_region
        %s336 = smul.u32 16, %s18
        %p337 = scmp.lt.s32.totalorder %s336, 31
        %s338 = scalar_select %p337, %s336, 31
        %s339 = smul.addr %s338, 8
        %s340 = scalar_lea.vmem %s0, %s339
        %s341 = smul.u32 16, %s18
      $region52: #{tpu_custom_call.1} parent=47 // pred_fallthru
        _
      // Predicated region
      $region53: #{tpu_custom_call.1} parent=47 // pred_check
        %p342 = pneg %p64
      $region54: #{tpu_custom_call.1} parent=47 // pred_check_branch
        %344 = sbr.rel (%p342) target = $region56
      $region55: #{tpu_custom_call.1} parent=47 // pred_region
        %s345 = smul.u32 16, %s18
        %p346 = scmp.lt.s32.totalorder %s345, 31
        %s347 = scalar_select %p346, %s345, 31
        %s348 = smul.addr %s347, 8
        %s349 = scalar_lea.vmem %s1, %s348
        %s350 = smul.u32 16, %s18
      $region56: #{tpu_custom_call.1} parent=47 // pred_fallthru
        _
    $region48: #{tpu_custom_call.1} parent=5 // pred_fallthru
      _
    %p351 = scmp.le.s32.totalorder 1, %s18
    %p352 = scmp.lt.s32.totalorder %s18, 3
    %p353 = pnand %p351, %p352
    %p354 = pneg %p353
    // Predicated region
    $region57: #{tpu_custom_call.1} parent=5 // pred_check
      _
    $region58: #{tpu_custom_call.1} parent=5 // pred_check_branch
      %356 = sbr.rel (%p353) target = $region60
    $region59: #{tpu_custom_call.1} parent=5 // pred_region
      %s357 = ssub.s32 %s18, 1
      %s358 = smul.u32 16, %s23
      %p359 = scmp.lt.s32.totalorder %s358, 31
      %s360 = scalar_select %p359, %s358, 31
      %s361 = smul.addr %s360, 8
      %s362 = scalar_lea.vmem %s0, %s361
      %p363 = pneg %p44
      %p364 = pneg %p41
      %s365 = smul.u32 16, %s23
      %p366 = scmp.lt.s32.totalorder %s365, 31
      %s367 = scalar_select %p366, %s365, 31
      %s368 = smul.addr %s367, 8
      %s369 = scalar_lea.vmem %s1, %s368
      %p370 = pneg %p70
      %p371 = pneg %p67
      %p372 = pneg %p91
      %p373 = pneg %p88
      %p374 = pneg %p112
      %p375 = pneg %p109
      %p376 = pneg %p133
      %p377 = pneg %p130
      %p378 = pneg %p154
      %p379 = pneg %p151
      %p380 = pneg %p175
      %p381 = pneg %p172
      %p382 = pneg %p196
      %p383 = pneg %p193
      %p384 = pneg %p217
      %p385 = pneg %p214
      %p386 = pneg %p238
      %p387 = pneg %p235
      %p388 = pneg %p264
      %p389 = pneg %p261
      %s390 = smul.u32 16, %s23
      %p391 = scmp.lt.s32.totalorder %s390, 31
      %s392 = scalar_select %p391, %s390, 31
      %s393 = smul.addr %s392, 8
      %s394 = scalar_lea.vmem %s10, %s393
      %p395 = pneg %p290
      %p396 = pneg %p287
      %s397 = smul.u32 16, %s23
      %p398 = scmp.lt.s32.totalorder %s397, 31
      %s399 = scalar_select %p398, %s397, 31
      %s400 = smul.addr %s399, 8
      %s401 = scalar_lea.vmem %s11, %s400
      %s402 = smul.u32 16, %s23
      %p403 = scmp.lt.s32.totalorder %s402, 31
      %s404 = scalar_select %p403, %s402, 31
      %s405 = smul.addr %s404, 8
      %s406 = scalar_lea.vmem %s0, %s405
      %s407 = smul.u32 16, %s23
      %s408 = smul.u32 16, %s23
      %p409 = scmp.lt.s32.totalorder %s408, 31
      %s410 = scalar_select %p409, %s408, 31
      %s411 = smul.addr %s410, 8
      %s412 = scalar_lea.vmem %s1, %s411
      %s413 = smul.u32 16, %s23
      %s414 = smul.u32 16, %s23
      %p415 = scmp.lt.s32.totalorder %s414, 31
      %s416 = scalar_select %p415, %s414, 31
      %s417 = smul.addr %s416, 8
      %s418 = scalar_lea.vmem %s10, %s417
      %s419 = smul.u32 16, %s23
      %s420 = smul.u32 16, %s23
      %p421 = scmp.lt.s32.totalorder %s420, 31
      %s422 = scalar_select %p421, %s420, 31
      %s423 = smul.addr %s422, 8
      %s424 = scalar_lea.vmem %s11, %s423
      %s425 = smul.u32 16, %s23
      %v427 = vld [vmem:[%s406] sm:$0xff]
      %v428 = vld [vmem:[%s406 + $0x8] sm:$0xff]
      %v429 = vld [vmem:[%s406 + $0x10] sm:$0xff]
      %v430 = vld [vmem:[%s406 + $0x18] sm:$0xff]
      %v431 = vld [vmem:[%s406 + $0x20] sm:$0xff]
      %v432 = vld [vmem:[%s406 + $0x28] sm:$0xff]
      %v433 = vld [vmem:[%s406 + $0x30] sm:$0xff]
      %v434 = vld [vmem:[%s406 + $0x38] sm:$0xff]
      %v435 = vld [vmem:[%s406 + $0x40] sm:$0xff]
      %v436 = vld [vmem:[%s406 + $0x48] sm:$0xff]
      %v437 = vld [vmem:[%s406 + $0x50] sm:$0xff]
      %v438 = vld [vmem:[%s406 + $0x58] sm:$0xff]
      %v439 = vld [vmem:[%s406 + $0x60] sm:$0xff]
      %v440 = vld [vmem:[%s406 + $0x68] sm:$0xff]
      %v441 = vld [vmem:[%s406 + $0x70] sm:$0xff]
      %v442 = vld [vmem:[%s406 + $0x78] sm:$0xff]
      %v443 = vpack.c.bf16 %v428, %v427
      %v444 = vpack.c.bf16 %v430, %v429
      %v445 = vpack.c.bf16 %v432, %v431
      %v446 = vpack.c.bf16 %v434, %v433
      %v447 = vpack.c.bf16 %v436, %v435
      %v448 = vpack.c.bf16 %v438, %v437
      %v449 = vpack.c.bf16 %v440, %v439
      %v450 = vpack.c.bf16 %v442, %v441
      %v451 = vld [vmem:[%s2] sm:$0xf]
      %v452 = vld [vmem:[%s2 + $0x4] sm:$0xf]
      %v453 = vld [vmem:[%s2 + $0x8] sm:$0xf]
      %v454 = vld [vmem:[%s2 + $0xc] sm:$0xf]
      %v455 = vld [vmem:[%s2 + $0x10] sm:$0xf]
      %v456 = vld [vmem:[%s2 + $0x14] sm:$0xf]
      %v457 = vld [vmem:[%s2 + $0x18] sm:$0xf]
      %v458 = vld [vmem:[%s2 + $0x1c] sm:$0xf]
      %v459 = vld [vmem:[%s3] sm:$0x1]
      %v461 = vperm.slane %v459, 0
      %v471 = vunpack.c.l.b16 %v451
      %v472 = vunpack.c.l.b16 %v452
      %v473 = vunpack.c.l.b16 %v453
      %v474 = vunpack.c.l.b16 %v454
      %v475 = vunpack.c.l.b16 %v455
      %v476 = vunpack.c.l.b16 %v456
      %v477 = vunpack.c.l.b16 %v457
      %v478 = vunpack.c.l.b16 %v458
      %v479 = vpack.c.b16 %v472, %v471
      %v480 = vpack.c.b16 %v474, %v473
      %v481 = vpack.c.b16 %v476, %v475
      %v482 = vpack.c.b16 %v478, %v477
      %vm487 = vcmask 523264
      %v489 = vsel %vm487, %v443, 0
      %v492 = vsel %vm487, %v444, 0
      %v495 = vsel %vm487, %v445, 0
      %v498 = vsel %vm487, %v446, 0
      %v501 = vsel %vm487, %v447, 0
      %v504 = vsel %vm487, %v448, 0
      %v507 = vsel %vm487, %v449, 0
      %v510 = vsel %vm487, %v450, 0
      %512 = vmatpush.bf16.msra.mxu0 0
      %513 = vmatpush.bf16.msra.mxu0 0
      %514 = vmatpush.bf16.msra.mxu0 0
      %515 = vmatpush.bf16.msra.mxu0 0
      %516 = vmatpush.bf16.msra.mxu0 %v482
      %517 = vmatpush.bf16.msra.mxu0 %v481
      %518 = vmatpush.bf16.msra.mxu0 %v480
      %519 = vmatpush.bf16.msra.mxu0 %v479
      %520 = vmatmul.bf16.gmra.mxu0 %v489
      %v521 = vpop.f32.mrf.mxu0
      %v522 = vadd.f32 %v461, %v521
      %v523 = vpop.f32.mrf.mxu0
      %v524 = vadd.f32 %v461, %v523
      %525 = vmatmul.bf16.gmra.mxu0 %v492
      %v526 = vpop.f32.mrf.mxu0
      %v527 = vadd.f32 %v461, %v526
      %v528 = vpop.f32.mrf.mxu0
      %v529 = vadd.f32 %v461, %v528
      %530 = vmatmul.bf16.gmra.mxu0 %v495
      %v531 = vpop.f32.mrf.mxu0
      %v532 = vadd.f32 %v461, %v531
      %v533 = vpop.f32.mrf.mxu0
      %v534 = vadd.f32 %v461, %v533
      %535 = vmatmul.bf16.gmra.mxu0 %v498
      %v536 = vpop.f32.mrf.mxu0
      %v537 = vadd.f32 %v461, %v536
      %v538 = vpop.f32.mrf.mxu0
      %v539 = vadd.f32 %v461, %v538
      %540 = vmatmul.bf16.gmra.mxu0 %v501
      %v541 = vpop.f32.mrf.mxu0
      %v542 = vadd.f32 %v461, %v541
      %v543 = vpop.f32.mrf.mxu0
      %v544 = vadd.f32 %v461, %v543
      %545 = vmatmul.bf16.gmra.mxu0 %v504
      %v546 = vpop.f32.mrf.mxu0
      %v547 = vadd.f32 %v461, %v546
      %v548 = vpop.f32.mrf.mxu0
      %v549 = vadd.f32 %v461, %v548
      %550 = vmatmul.bf16.gmra.mxu0 %v507
      %v551 = vpop.f32.mrf.mxu0
      %v552 = vadd.f32 %v461, %v551
      %v553 = vpop.f32.mrf.mxu0
      %v554 = vadd.f32 %v461, %v553
      %555 = vmatmul.bf16.gmra.mxu0 %v510
      %v556 = vpop.f32.mrf.mxu0
      %v557 = vadd.f32 %v461, %v556
      %v558 = vpop.f32.mrf.mxu0
      %v559 = vadd.f32 %v461, %v558
      %560 = vdwg.mxu0
      %v561 = vtanh.pop %v522
      %v562 = vtanh.pop %v524
      %v563 = vtanh.pop %v527
      %v564 = vtanh.pop %v529
      %v565 = vtanh.pop %v532
      %v566 = vtanh.pop %v534
      %v567 = vtanh.pop %v537
      %v568 = vtanh.pop %v539
      %v569 = vtanh.pop %v542
      %v570 = vtanh.pop %v544
      %v571 = vtanh.pop %v547
      %v572 = vtanh.pop %v549
      %v573 = vtanh.pop %v552
      %v574 = vtanh.pop %v554
      %v575 = vtanh.pop %v557
      %v576 = vtanh.pop %v559
      %v577 = vpack.c.bf16 %v562, %v561
      %v578 = vpack.c.bf16 %v564, %v563
      %v579 = vpack.c.bf16 %v566, %v565
      %v580 = vpack.c.bf16 %v568, %v567
      %v581 = vpack.c.bf16 %v570, %v569
      %v582 = vpack.c.bf16 %v572, %v571
      %v583 = vpack.c.bf16 %v574, %v573
      %v584 = vpack.c.bf16 %v576, %v575
      %v585 = vld [vmem:[%s4] sm:$0xf]
      %v586 = vld [vmem:[%s4 + $0x4] sm:$0xf]
      %v587 = vld [vmem:[%s4 + $0x8] sm:$0xf]
      %v588 = vld [vmem:[%s4 + $0xc] sm:$0xf]
      %v589 = vld [vmem:[%s5] sm:$0x1]
      %v591 = vperm.slane %v589, 0
      %v597 = vunpack.c.l.b16 %v585
      %v598 = vunpack.c.l.b16 %v586
      %v599 = vunpack.c.l.b16 %v587
      %v600 = vunpack.c.l.b16 %v588
      %v601 = vpack.c.b16 %v598, %v597
      %v602 = vpack.c.b16 %v600, %v599
      %vm605 = vcmask 261120
      %v607 = vsel %vm605, %v577, 0
      %v610 = vsel %vm605, %v578, 0
      %v613 = vsel %vm605, %v579, 0
      %v616 = vsel %vm605, %v580, 0
      %v619 = vsel %vm605, %v581, 0
      %v622 = vsel %vm605, %v582, 0
      %v625 = vsel %vm605, %v583, 0
      %v628 = vsel %vm605, %v584, 0
      %630 = vmatpush.bf16.msra.mxu0 0
      %631 = vmatpush.bf16.msra.mxu0 0
      %632 = vmatpush.bf16.msra.mxu0 0
      %633 = vmatpush.bf16.msra.mxu0 0
      %634 = vmatpush.bf16.msra.mxu0 0
      %635 = vmatpush.bf16.msra.mxu0 0
      %636 = vmatpush.bf16.msra.mxu0 %v602
      %637 = vmatpush.bf16.msra.mxu0 %v601
      %638 = vmatmul.bf16.gmra.mxu0 %v607
      %v639 = vpop.f32.mrf.mxu0
      %v640 = vadd.f32 %v591, %v639
      %v641 = vpop.f32.mrf.mxu0
      %v642 = vadd.f32 %v591, %v641
      %643 = vmatmul.bf16.gmra.mxu0 %v610
      %v644 = vpop.f32.mrf.mxu0
      %v645 = vadd.f32 %v591, %v644
      %v646 = vpop.f32.mrf.mxu0
      %v647 = vadd.f32 %v591, %v646
      %648 = vmatmul.bf16.gmra.mxu0 %v613
      %v649 = vpop.f32.mrf.mxu0
      %v650 = vadd.f32 %v591, %v649
      %v651 = vpop.f32.mrf.mxu0
      %v652 = vadd.f32 %v591, %v651
      %653 = vmatmul.bf16.gmra.mxu0 %v616
      %v654 = vpop.f32.mrf.mxu0
      %v655 = vadd.f32 %v591, %v654
      %v656 = vpop.f32.mrf.mxu0
      %v657 = vadd.f32 %v591, %v656
      %658 = vmatmul.bf16.gmra.mxu0 %v619
      %v659 = vpop.f32.mrf.mxu0
      %v660 = vadd.f32 %v591, %v659
      %v661 = vpop.f32.mrf.mxu0
      %v662 = vadd.f32 %v591, %v661
      %663 = vmatmul.bf16.gmra.mxu0 %v622
      %v664 = vpop.f32.mrf.mxu0
      %v665 = vadd.f32 %v591, %v664
      %v666 = vpop.f32.mrf.mxu0
      %v667 = vadd.f32 %v591, %v666
      %668 = vmatmul.bf16.gmra.mxu0 %v625
      %v669 = vpop.f32.mrf.mxu0
      %v670 = vadd.f32 %v591, %v669
      %v671 = vpop.f32.mrf.mxu0
      %v672 = vadd.f32 %v591, %v671
      %673 = vmatmul.bf16.gmra.mxu0 %v628
      %v674 = vpop.f32.mrf.mxu0
      %v675 = vadd.f32 %v591, %v674
      %v676 = vpop.f32.mrf.mxu0
      %v677 = vadd.f32 %v591, %v676
      %678 = vdwg.mxu0
      %v679 = vld [vmem:[%s412] sm:$0xff]
      %v680 = vld [vmem:[%s412 + $0x8] sm:$0xff]
      %v681 = vld [vmem:[%s412 + $0x10] sm:$0xff]
      %v682 = vld [vmem:[%s412 + $0x18] sm:$0xff]
      %v683 = vld [vmem:[%s412 + $0x20] sm:$0xff]
      %v684 = vld [vmem:[%s412 + $0x28] sm:$0xff]
      %v685 = vld [vmem:[%s412 + $0x30] sm:$0xff]
      %v686 = vld [vmem:[%s412 + $0x38] sm:$0xff]
      %v687 = vld [vmem:[%s412 + $0x40] sm:$0xff]
      %v688 = vld [vmem:[%s412 + $0x48] sm:$0xff]
      %v689 = vld [vmem:[%s412 + $0x50] sm:$0xff]
      %v690 = vld [vmem:[%s412 + $0x58] sm:$0xff]
      %v691 = vld [vmem:[%s412 + $0x60] sm:$0xff]
      %v692 = vld [vmem:[%s412 + $0x68] sm:$0xff]
      %v693 = vld [vmem:[%s412 + $0x70] sm:$0xff]
      %v694 = vld [vmem:[%s412 + $0x78] sm:$0xff]
      %v695 = vmul.f32 %v640, 0.5
      %v696 = vmul.f32 %v642, 0.5
      %v697 = vmul.f32 %v645, 0.5
      %v698 = vmul.f32 %v647, 0.5
      %v699 = vmul.f32 %v650, 0.5
      %v700 = vmul.f32 %v652, 0.5
      %v701 = vmul.f32 %v655, 0.5
      %v702 = vmul.f32 %v657, 0.5
      %v703 = vmul.f32 %v660, 0.5
      %v704 = vmul.f32 %v662, 0.5
      %v705 = vmul.f32 %v665, 0.5
      %v706 = vmul.f32 %v667, 0.5
      %v707 = vmul.f32 %v670, 0.5
      %v708 = vmul.f32 %v672, 0.5
      %v709 = vmul.f32 %v675, 0.5
      %v710 = vmul.f32 %v677, 0.5
      %v711 = vmul.f32 %v695, 1.442695
      %v712 = vpow.pop %v711
      %v713 = vmul.f32 %v696, 1.442695
      %v714 = vpow.pop %v713
      %v715 = vmul.f32 %v697, 1.442695
      %v716 = vpow.pop %v715
      %v717 = vmul.f32 %v698, 1.442695
      %v718 = vpow.pop %v717
      %v719 = vmul.f32 %v699, 1.442695
      %v720 = vpow.pop %v719
      %v721 = vmul.f32 %v700, 1.442695
      %v722 = vpow.pop %v721
      %v723 = vmul.f32 %v701, 1.442695
      %v724 = vpow.pop %v723
      %v725 = vmul.f32 %v702, 1.442695
      %v726 = vpow.pop %v725
      %v727 = vmul.f32 %v703, 1.442695
      %v728 = vpow.pop %v727
      %v729 = vmul.f32 %v704, 1.442695
      %v730 = vpow.pop %v729
      %v731 = vmul.f32 %v705, 1.442695
      %v732 = vpow.pop %v731
      %v733 = vmul.f32 %v706, 1.442695
      %v734 = vpow.pop %v733
      %v735 = vmul.f32 %v707, 1.442695
      %v736 = vpow.pop %v735
      %v737 = vmul.f32 %v708, 1.442695
      %v738 = vpow.pop %v737
      %v739 = vmul.f32 %v709, 1.442695
      %v740 = vpow.pop %v739
      %v741 = vmul.f32 %v710, 1.442695
      %v742 = vpow.pop %v741
      %759 = vrot.lane.b32.xlu0 %v712, 120
      %v760 = vpop.permute.xlu0 %759
      %761 = vrot.lane.b32.xlu0 %v714, 120
      %v762 = vpop.permute.xlu0 %761
      %763 = vrot.lane.b32.xlu0 %v716, 120
      %v764 = vpop.permute.xlu0 %763
      %765 = vrot.lane.b32.xlu0 %v718, 120
      %v766 = vpop.permute.xlu0 %765
      %767 = vrot.lane.b32.xlu0 %v720, 120
      %v768 = vpop.permute.xlu0 %767
      %769 = vrot.lane.b32.xlu0 %v722, 120
      %v770 = vpop.permute.xlu0 %769
      %771 = vrot.lane.b32.xlu0 %v724, 120
      %v772 = vpop.permute.xlu0 %771
      %773 = vrot.lane.b32.xlu0 %v726, 120
      %v774 = vpop.permute.xlu0 %773
      %775 = vrot.lane.b32.xlu0 %v728, 120
      %v776 = vpop.permute.xlu0 %775
      %777 = vrot.lane.b32.xlu0 %v730, 120
      %v778 = vpop.permute.xlu0 %777
      %779 = vrot.lane.b32.xlu0 %v732, 120
      %v780 = vpop.permute.xlu0 %779
      %781 = vrot.lane.b32.xlu0 %v734, 120
      %v782 = vpop.permute.xlu0 %781
      %783 = vrot.lane.b32.xlu0 %v736, 120
      %v784 = vpop.permute.xlu0 %783
      %785 = vrot.lane.b32.xlu0 %v738, 120
      %v786 = vpop.permute.xlu0 %785
      %787 = vrot.lane.b32.xlu0 %v740, 120
      %v788 = vpop.permute.xlu0 %787
      %789 = vrot.lane.b32.xlu0 %v742, 120
      %v790 = vpop.permute.xlu0 %789
      %v807 = vmul.f32 %v679, %v760
      %v808 = vmul.f32 %v680, %v762
      %v809 = vmul.f32 %v681, %v764
      %v810 = vmul.f32 %v682, %v766
      %v811 = vmul.f32 %v683, %v768
      %v812 = vmul.f32 %v684, %v770
      %v813 = vmul.f32 %v685, %v772
      %v814 = vmul.f32 %v686, %v774
      %v815 = vmul.f32 %v687, %v776
      %v816 = vmul.f32 %v688, %v778
      %v817 = vmul.f32 %v689, %v780
      %v818 = vmul.f32 %v690, %v782
      %v819 = vmul.f32 %v691, %v784
      %v820 = vmul.f32 %v692, %v786
      %v821 = vmul.f32 %v693, %v788
      %v822 = vmul.f32 %v694, %v790
      %v823 = vadd.f32 %v640, %v807
      %v824 = vadd.f32 %v642, %v808
      %v825 = vadd.f32 %v645, %v809
      %v826 = vadd.f32 %v647, %v810
      %v827 = vadd.f32 %v650, %v811
      %v828 = vadd.f32 %v652, %v812
      %v829 = vadd.f32 %v655, %v813
      %v830 = vadd.f32 %v657, %v814
      %v831 = vadd.f32 %v660, %v815
      %v832 = vadd.f32 %v662, %v816
      %v833 = vadd.f32 %v665, %v817
      %v834 = vadd.f32 %v667, %v818
      %v835 = vadd.f32 %v670, %v819
      %v836 = vadd.f32 %v672, %v820
      %v837 = vadd.f32 %v675, %v821
      %v838 = vadd.f32 %v677, %v822
      %v839 = vpack.c.bf16 %v824, %v823
      %v840 = vpack.c.bf16 %v826, %v825
      %v841 = vpack.c.bf16 %v828, %v827
      %v842 = vpack.c.bf16 %v830, %v829
      %v843 = vpack.c.bf16 %v832, %v831
      %v844 = vpack.c.bf16 %v834, %v833
      %v845 = vpack.c.bf16 %v836, %v835
      %v846 = vpack.c.bf16 %v838, %v837
      %v847 = vld [vmem:[%s6] sm:$0xf]
      %v848 = vld [vmem:[%s7] sm:$0x1]
      %v850 = vperm.slane %v848, 0
      %vm852 = vcmask 64512
      %v854 = vsel %vm852, %v839, 0
      %v857 = vsel %vm852, %v840, 0
      %v860 = vsel %vm852, %v841, 0
      %v863 = vsel %vm852, %v842, 0
      %v866 = vsel %vm852, %v843, 0
      %v869 = vsel %vm852, %v844, 0
      %v872 = vsel %vm852, %v845, 0
      %v875 = vsel %vm852, %v846, 0
      %vm877 = vcmask 1043456
      %v879 = vsel %vm877, %v847, 0
      %881 = vmatpush.bf16.msra.mxu0 0
      %882 = vmatpush.bf16.msra.mxu0 0
      %883 = vmatpush.bf16.msra.mxu0 0
      %884 = vmatpush.bf16.msra.mxu0 0
      %885 = vmatpush.bf16.msra.mxu0 0
      %886 = vmatpush.bf16.msra.mxu0 0
      %887 = vmatpush.bf16.msra.mxu0 0
      %888 = vmatpush.bf16.msra.mxu0 %v879
      %889 = vmatmul.bf16.gmra.mxu0 %v854
      %v890 = vpop.f32.mrf.mxu0
      %v891 = vadd.f32 %v850, %v890
      %v892 = vpop.f32.mrf.mxu0
      %v893 = vadd.f32 %v850, %v892
      %894 = vmatmul.bf16.gmra.mxu0 %v857
      %v895 = vpop.f32.mrf.mxu0
      %v896 = vadd.f32 %v850, %v895
      %v897 = vpop.f32.mrf.mxu0
      %v898 = vadd.f32 %v850, %v897
      %899 = vmatmul.bf16.gmra.mxu0 %v860
      %v900 = vpop.f32.mrf.mxu0
      %v901 = vadd.f32 %v850, %v900
      %v902 = vpop.f32.mrf.mxu0
      %v903 = vadd.f32 %v850, %v902
      %904 = vmatmul.bf16.gmra.mxu0 %v863
      %v905 = vpop.f32.mrf.mxu0
      %v906 = vadd.f32 %v850, %v905
      %v907 = vpop.f32.mrf.mxu0
      %v908 = vadd.f32 %v850, %v907
      %909 = vmatmul.bf16.gmra.mxu0 %v866
      %v910 = vpop.f32.mrf.mxu0
      %v911 = vadd.f32 %v850, %v910
      %v912 = vpop.f32.mrf.mxu0
      %v913 = vadd.f32 %v850, %v912
      %914 = vmatmul.bf16.gmra.mxu0 %v869
      %v915 = vpop.f32.mrf.mxu0
      %v916 = vadd.f32 %v850, %v915
      %v917 = vpop.f32.mrf.mxu0
      %v918 = vadd.f32 %v850, %v917
      %919 = vmatmul.bf16.gmra.mxu0 %v872
      %v920 = vpop.f32.mrf.mxu0
      %v921 = vadd.f32 %v850, %v920
      %v922 = vpop.f32.mrf.mxu0
      %v923 = vadd.f32 %v850, %v922
      %924 = vmatmul.bf16.gmra.mxu0 %v875
      %v925 = vpop.f32.mrf.mxu0
      %v926 = vadd.f32 %v850, %v925
      %v927 = vpop.f32.mrf.mxu0
      %v928 = vadd.f32 %v850, %v927
      %929 = vdwg.mxu0
      %v930 = vtanh.pop %v891
      %v931 = vtanh.pop %v893
      %v932 = vtanh.pop %v896
      %v933 = vtanh.pop %v898
      %v934 = vtanh.pop %v901
      %v935 = vtanh.pop %v903
      %v936 = vtanh.pop %v906
      %v937 = vtanh.pop %v908
      %v938 = vtanh.pop %v911
      %v939 = vtanh.pop %v913
      %v940 = vtanh.pop %v916
      %v941 = vtanh.pop %v918
      %v942 = vtanh.pop %v921
      %v943 = vtanh.pop %v923
      %v944 = vtanh.pop %v926
      %v945 = vtanh.pop %v928
      %v946 = vpack.c.bf16 %v931, %v930
      %v947 = vpack.c.bf16 %v933, %v932
      %v948 = vpack.c.bf16 %v935, %v934
      %v949 = vpack.c.bf16 %v937, %v936
      %v950 = vpack.c.bf16 %v939, %v938
      %v951 = vpack.c.bf16 %v941, %v940
      %v952 = vpack.c.bf16 %v943, %v942
      %v953 = vpack.c.bf16 %v945, %v944
      %v954 = vld [vmem:[%s8] sm:$0xf]
      %v955 = vld [vmem:[%s8 + $0x4] sm:$0xf]
      %v956 = vld [vmem:[%s8 + $0x8] sm:$0xf]
      %v957 = vld [vmem:[%s8 + $0xc] sm:$0xf]
      %v958 = vld [vmem:[%s9] sm:$0x1]
      %v960 = vperm.slane %v958, 0
      %v966 = vunpack.c.l.b16 %v954
      %v967 = vunpack.c.l.b16 %v955
      %v968 = vunpack.c.l.b16 %v956
      %v969 = vunpack.c.l.b16 %v957
      %v970 = vpack.c.b16 %v967, %v966
      %v971 = vpack.c.b16 %v969, %v968
      %v975 = vsel %vm605, %v946, 0
      %v978 = vsel %vm605, %v947, 0
      %v981 = vsel %vm605, %v948, 0
      %v984 = vsel %vm605, %v949, 0
      %v987 = vsel %vm605, %v950, 0
      %v990 = vsel %vm605, %v951, 0
      %v993 = vsel %vm605, %v952, 0
      %v996 = vsel %vm605, %v953, 0
      %998 = vmatpush.bf16.msra.mxu0 0
      %999 = vmatpush.bf16.msra.mxu0 0
      %1000 = vmatpush.bf16.msra.mxu0 0
      %1001 = vmatpush.bf16.msra.mxu0 0
      %1002 = vmatpush.bf16.msra.mxu0 0
      %1003 = vmatpush.bf16.msra.mxu0 0
      %1004 = vmatpush.bf16.msra.mxu0 %v971
      %1005 = vmatpush.bf16.msra.mxu0 %v970
      %1006 = vmatmul.bf16.gmra.mxu0 %v975
      %v1007 = vpop.f32.mrf.mxu0
      %v1008 = vadd.f32 %v960, %v1007
      %v1009 = vpop.f32.mrf.mxu0
      %v1010 = vadd.f32 %v960, %v1009
      %1011 = vmatmul.bf16.gmra.mxu0 %v978
      %v1012 = vpop.f32.mrf.mxu0
      %v1013 = vadd.f32 %v960, %v1012
      %v1014 = vpop.f32.mrf.mxu0
      %v1015 = vadd.f32 %v960, %v1014
      %1016 = vmatmul.bf16.gmra.mxu0 %v981
      %v1017 = vpop.f32.mrf.mxu0
      %v1018 = vadd.f32 %v960, %v1017
      %v1019 = vpop.f32.mrf.mxu0
      %v1020 = vadd.f32 %v960, %v1019
      %1021 = vmatmul.bf16.gmra.mxu0 %v984
      %v1022 = vpop.f32.mrf.mxu0
      %v1023 = vadd.f32 %v960, %v1022
      %v1024 = vpop.f32.mrf.mxu0
      %v1025 = vadd.f32 %v960, %v1024
      %1026 = vmatmul.bf16.gmra.mxu0 %v987
      %v1027 = vpop.f32.mrf.mxu0
      %v1028 = vadd.f32 %v960, %v1027
      %v1029 = vpop.f32.mrf.mxu0
      %v1030 = vadd.f32 %v960, %v1029
      %1031 = vmatmul.bf16.gmra.mxu0 %v990
      %v1032 = vpop.f32.mrf.mxu0
      %v1033 = vadd.f32 %v960, %v1032
      %v1034 = vpop.f32.mrf.mxu0
      %v1035 = vadd.f32 %v960, %v1034
      %1036 = vmatmul.bf16.gmra.mxu0 %v993
      %v1037 = vpop.f32.mrf.mxu0
      %v1038 = vadd.f32 %v960, %v1037
      %v1039 = vpop.f32.mrf.mxu0
      %v1040 = vadd.f32 %v960, %v1039
      %1041 = vmatmul.bf16.gmra.mxu0 %v996
      %v1042 = vpop.f32.mrf.mxu0
      %v1043 = vadd.f32 %v960, %v1042
      %v1044 = vpop.f32.mrf.mxu0
      %v1045 = vadd.f32 %v960, %v1044
      %1046 = vdwg.mxu0
      %1047 = vst.msk [vmem:[%s418] sm:$0xff] %vm487, %v1008
      %1048 = vst.msk [vmem:[%s418 + $0x8] sm:$0xff] %vm487, %v1010
      %1049 = vst.msk [vmem:[%s418 + $0x10] sm:$0xff] %vm487, %v1013
      %1050 = vst.msk [vmem:[%s418 + $0x18] sm:$0xff] %vm487, %v1015
      %1051 = vst.msk [vmem:[%s418 + $0x20] sm:$0xff] %vm487, %v1018
      %1052 = vst.msk [vmem:[%s418 + $0x28] sm:$0xff] %vm487, %v1020
      %1053 = vst.msk [vmem:[%s418 + $0x30] sm:$0xff] %vm487, %v1023
      %1054 = vst.msk [vmem:[%s418 + $0x38] sm:$0xff] %vm487, %v1025
      %1055 = vst.msk [vmem:[%s418 + $0x40] sm:$0xff] %vm487, %v1028
      %1056 = vst.msk [vmem:[%s418 + $0x48] sm:$0xff] %vm487, %v1030
      %1057 = vst.msk [vmem:[%s418 + $0x50] sm:$0xff] %vm487, %v1033
      %1058 = vst.msk [vmem:[%s418 + $0x58] sm:$0xff] %vm487, %v1035
      %1059 = vst.msk [vmem:[%s418 + $0x60] sm:$0xff] %vm487, %v1038
      %1060 = vst.msk [vmem:[%s418 + $0x68] sm:$0xff] %vm487, %v1040
      %1061 = vst.msk [vmem:[%s418 + $0x70] sm:$0xff] %vm487, %v1043
      %1062 = vst.msk [vmem:[%s418 + $0x78] sm:$0xff] %vm487, %v1045
      %vm1063 = vcmask 130048
      %1064 = vst.msk [vmem:[%s424] sm:$0xff] %vm1063, %v640
      %1065 = vst.msk [vmem:[%s424 + $0x8] sm:$0xff] %vm1063, %v642
      %1066 = vst.msk [vmem:[%s424 + $0x10] sm:$0xff] %vm1063, %v645
      %1067 = vst.msk [vmem:[%s424 + $0x18] sm:$0xff] %vm1063, %v647
      %1068 = vst.msk [vmem:[%s424 + $0x20] sm:$0xff] %vm1063, %v650
      %1069 = vst.msk [vmem:[%s424 + $0x28] sm:$0xff] %vm1063, %v652
      %1070 = vst.msk [vmem:[%s424 + $0x30] sm:$0xff] %vm1063, %v655
      %1071 = vst.msk [vmem:[%s424 + $0x38] sm:$0xff] %vm1063, %v657
      %1072 = vst.msk [vmem:[%s424 + $0x40] sm:$0xff] %vm1063, %v660
      %1073 = vst.msk [vmem:[%s424 + $0x48] sm:$0xff] %vm1063, %v662
      %1074 = vst.msk [vmem:[%s424 + $0x50] sm:$0xff] %vm1063, %v665
      %1075 = vst.msk [vmem:[%s424 + $0x58] sm:$0xff] %vm1063, %v667
      %1076 = vst.msk [vmem:[%s424 + $0x60] sm:$0xff] %vm1063, %v670
      %1077 = vst.msk [vmem:[%s424 + $0x68] sm:$0xff] %vm1063, %v672
      %1078 = vst.msk [vmem:[%s424 + $0x70] sm:$0xff] %vm1063, %v675
      %1079 = vst.msk [vmem:[%s424 + $0x78] sm:$0xff] %vm1063, %v677
      %s1080 = smul.u32 16, %s23
      %p1081 = scmp.lt.s32.totalorder %s1080, 31
      %s1082 = scalar_select %p1081, %s1080, 31
      %s1083 = smul.addr %s1082, 8
      %s1084 = scalar_lea.vmem %s10, %s1083
      %s1085 = smul.u32 16, %s23
      %p1086 = scmp.lt.s32.totalorder %s1085, 31
      %s1087 = scalar_select %p1086, %s1085, 31
      %s1088 = smul.addr %s1087, 8
      %s1089 = scalar_lea.vmem %s11, %s1088
      // Predicated region
      $region61: #{tpu_custom_call.1} parent=59 // pred_check
        %p1090 = pneg %p261
      $region62: #{tpu_custom_call.1} parent=59 // pred_check_branch
        %1092 = sbr.rel (%p1090) target = $region64
      $region63: #{tpu_custom_call.1} parent=59 // pred_region
        %s1093 = smul.u32 16, %s23
      $region64: #{tpu_custom_call.1} parent=59 // pred_fallthru
        _
      // Predicated region
      $region65: #{tpu_custom_call.1} parent=59 // pred_check
        %p1094 = pneg %p287
      $region66: #{tpu_custom_call.1} parent=59 // pred_check_branch
        %1096 = sbr.rel (%p1094) target = $region68
      $region67: #{tpu_custom_call.1} parent=59 // pred_region
        %s1097 = smul.u32 16, %s23
      $region68: #{tpu_custom_call.1} parent=59 // pred_fallthru
        _
    $region60: #{tpu_custom_call.1} parent=5 // pred_fallthru
      _
    %p1098 = scmp.le.s32.totalorder 2, %s18
    // Predicated region
    $region69: #{tpu_custom_call.1} parent=5 // pred_check
      %p1099 = pneg %p1098
    $region70: #{tpu_custom_call.1} parent=5 // pred_check_branch
      %1101 = sbr.rel (%p1099) target = $region72
    $region71: #{tpu_custom_call.1} parent=5 // pred_region
      %s1102 = ssub.s32 %s18, 2
      // Predicated region
      $region73: #{tpu_custom_call.1} parent=71 // pred_check
        %p1103 = pneg %p267
      $region74: #{tpu_custom_call.1} parent=71 // pred_check_branch
        %1105 = sbr.rel (%p1103) target = $region76
      $region75: #{tpu_custom_call.1} parent=71 // pred_region
        %s1106 = smul.u32 16, %s24
        %p1107 = scmp.lt.s32.totalorder %s1106, 31
        %s1108 = scalar_select %p1107, %s1106, 31
        %s1109 = smul.addr %s1108, 8
        %s1110 = scalar_lea.vmem %s10, %s1109
      $region76: #{tpu_custom_call.1} parent=71 // pred_fallthru
        _
      // Predicated region
      $region77: #{tpu_custom_call.1} parent=71 // pred_check
        %p1111 = pneg %p293
      $region78: #{tpu_custom_call.1} parent=71 // pred_check_branch
        %1113 = sbr.rel (%p1111) target = $region80
      $region79: #{tpu_custom_call.1} parent=71 // pred_region
        %s1114 = smul.u32 16, %s24
        %p1115 = scmp.lt.s32.totalorder %s1114, 31
        %s1116 = scalar_select %p1115, %s1114, 31
        %s1117 = smul.addr %s1116, 8
        %s1118 = scalar_lea.vmem %s11, %s1117
      $region80: #{tpu_custom_call.1} parent=71 // pred_fallthru
        _
    $region72: #{tpu_custom_call.1} parent=5 // pred_fallthru
      _
  $region6: #{tpu_custom_call.1} parent=0 // loop_footer
    %s22 = sadd.s32 1, %s18
  $region7: #{tpu_custom_call.1} parent=0 // loop_footer_branch
    %17 = sbr.rel target = $region3
  $region8: #{tpu_custom_call.1} parent=0 // loop_exit
    _

</llo_original>
